<compile_context>
chip_gen: v7x
topology: tpu7x:2x2x1
jax: 0.10.0
libtpu: 0.0.40
codegen_flags: <defaults>
</compile_context>

<pallas_src>
import functools
import math

import jax
import jax.numpy as jnp
from jax.experimental import pallas as pl
from jax.experimental.pallas import tpu as pltpu

_LN_EPS = 1e-5
_LANE = 128


# ---------------------------------------------------------------------------
# Kernel 1: symmetric-normalization vector  d = (1 + colsum(adj)) ** -0.5
# (hoisted out of the per-layer math; computed once per forward pass).
# ---------------------------------------------------------------------------
def _degree_kernel(adj_ref, d_ref):
    i = pl.program_id(1)                          # row-tile (reduction) axis

    @pl.when(i == 0)
    def _init():
        d_ref[...] = jnp.ones_like(d_ref)         # the "+1" from builtin sum(adj, 1)

    d_ref[...] += jnp.sum(adj_ref[...], axis=0, keepdims=True)

    @pl.when(i == pl.num_programs(1) - 1)
    def _finalize():
        d_ref[...] = jax.lax.rsqrt(d_ref[...])    # EUP rsqrt


def _compute_dvec(adj_pad, tile):
    n_pad = adj_pad.shape[0]
    nt = n_pad // tile
    d_row = pl.pallas_call(
        _degree_kernel,
        out_shape=jax.ShapeDtypeStruct((1, n_pad), jnp.float32),
        grid_spec=pltpu.PrefetchScalarGridSpec(
            num_scalar_prefetch=0,
            grid=(nt, nt),                        # (col-tile, row-tile)
            in_specs=[pl.BlockSpec((tile, tile), lambda k, i: (i, k))],
            out_specs=pl.BlockSpec((1, tile), lambda k, i: (0, k)),
        ),
        compiler_params=pltpu.CompilerParams(
            dimension_semantics=("parallel", "arbitrary")),
    )(adj_pad)
    return d_row.T                                # (n_pad, 1) per-node D^-1/2 scale


# ---------------------------------------------------------------------------
# Kernel 2: the whole GraphBaseBlock (all layers) in one fused kernel.
# ---------------------------------------------------------------------------
def _gcn_block_kernel(x0_ref, d_ref, adj_ref, w_ref, b_ref, g_ref, bt_ref,
                      o_ref, x_buf, acc_ref, *,
                      n_layers, n_pad, f_true, tile_m, tile_k):
    l = pl.program_id(0)          # layer (must be sequential)
    i = pl.program_id(1)          # output row tile
    k = pl.program_id(2)          # adjacency column / reduction tile (innermost)
    nk = pl.num_programs(2)

    # Ping-pong offsets into the flattened (2*n_pad, Fp) activation scratch.
    prev_off = ((l + 1) % 2) * n_pad      # layer (l-1) activations
    cur_off = (l % 2) * n_pad             # layer l output

    row0 = pl.multiple_of(i * tile_m, tile_m)
    col0 = pl.multiple_of(k * tile_k, tile_k)

    # One-time bootstrap: stage the padded input features into the "prev" slot.
    @pl.when((l == 0) & (i == 0) & (k == 0))
    def _bootstrap():
        x_buf[pl.ds(n_pad, n_pad), :] = x0_ref[...]

    @pl.when(k == 0)
    def _zero_acc():
        acc_ref[...] = jnp.zeros_like(acc_ref)

    # acc[i] += adj[i, k] @ (d * x_prev)[k]       (bf16 MXU, f32 accumulation)
    xk = x_buf[pl.ds(pl.multiple_of(prev_off + col0, tile_k), tile_k), :]
    dk = d_ref[pl.ds(col0, tile_k), :]
    xs = (dk * xk).astype(adj_ref.dtype)
    acc_ref[...] += jnp.dot(adj_ref[...], xs, preferred_element_type=jnp.float32)

    @pl.when(k == nk - 1)
    def _finalize_row_tile():
        xi = x_buf[pl.ds(pl.multiple_of(prev_off + row0, tile_m), tile_m), :]
        di = d_ref[pl.ds(row0, tile_m), :]
        agg = di * acc_ref[...]                   # == (D^-1/2 A D^-1/2 x)[row tile]
        # Fused K = 2*Fp matmul:  [agg | x] @ [[W],[W_self]] = agg@W + x@W_self
        z = jnp.concatenate([agg, xi], axis=-1)
        out = jnp.dot(z, w_ref[0], preferred_element_type=jnp.float32)
        out = out + b_ref[0]
        # ReLU; dropout is identity in eval mode; residual requires F_in == F_out.
        # TODO(synk): training-mode stochastic dropout (p=0.1) is not modeled.
        h = jnp.maximum(out, 0.0) + xi
        # LayerNorm over the TRUE feature width (padded lanes masked out).
        lanes = jax.lax.broadcasted_iota(jnp.int32, (1, h.shape[-1]), 1)
        mask = (lanes < f_true).astype(jnp.float32)
        inv_f = 1.0 / float(f_true)
        mean = jnp.sum(h * mask, axis=-1, keepdims=True) * inv_f
        cen = (h - mean) * mask
        var = jnp.sum(cen * cen, axis=-1, keepdims=True) * inv_f
        y = cen * jax.lax.rsqrt(var + _LN_EPS) * g_ref[0] + bt_ref[0]
        x_buf[pl.ds(pl.multiple_of(cur_off + row0, tile_m), tile_m), :] = y

    @pl.when((k == nk - 1) & (l == n_layers - 1))
    def _write_output():
        o_ref[pl.ds(row0, tile_m), :] = (
            x_buf[pl.ds(pl.multiple_of(cur_off + row0, tile_m), tile_m), :])


def gcn_block_forward(x, adj, layer_params, *, tile_n=128):
    """All GraphConvolutionBS layers of a GraphBaseBlock in one pallas_call."""
    n, f = x.shape
    n_layers = len(layer_params)
    assert n_layers >= 1
    for (w, w_self, _b, _g, _bt) in layer_params:
        assert w.shape == (f, f) and w_self.shape == (f, f), (
            "the fused residual block requires a homogeneous feature size")
    assert tile_n % _LANE == 0

    f_pad = -(-f // _LANE) * _LANE
    tile = tile_n
    n_pad = -(-n // tile) * tile

    x_pad = jnp.zeros((n_pad, f_pad), jnp.float32).at[:n, :f].set(
        x.astype(jnp.float32))
    adj_pad = jnp.zeros((n_pad, n_pad), jnp.float32).at[:n, :n].set(
        adj.astype(jnp.float32))
    adj_lo = adj_pad.astype(jnp.bfloat16)     # MXU / HBM adjacency stream in bf16

    d = _compute_dvec(adj_pad, tile)          # (n_pad, 1) f32, exact degrees

    # Stack per-layer parameters; zero-pad features to the lane-dense width.
    wcat = jnp.zeros((n_layers, 2 * f_pad, f_pad), jnp.float32)
    bias = jnp.zeros((n_layers, 1, f_pad), jnp.float32)
    gamma = jnp.zeros((n_layers, 1, f_pad), jnp.float32)
    beta = jnp.zeros((n_layers, 1, f_pad), jnp.float32)
    for idx, (w, w_self, b, g, bt) in enumerate(layer_params):
        wcat = wcat.at[idx, :f, :f].set(w.astype(jnp.float32))
        wcat = wcat.at[idx, f_pad:f_pad + f, :f].set(w_self.astype(jnp.float32))
        bias = bias.at[idx, 0, :f].set(jnp.reshape(b, (-1,)).astype(jnp.float32))
        gamma = gamma.at[idx, 0, :f].set(jnp.reshape(g, (-1,)).astype(jnp.float32))
        beta = beta.at[idx, 0, :f].set(jnp.reshape(bt, (-1,)).astype(jnp.float32))

    nt = n_pad // tile
    kernel = functools.partial(
        _gcn_block_kernel, n_layers=n_layers, n_pad=n_pad, f_true=f,
        tile_m=tile, tile_k=tile)

    out_pad = pl.pallas_call(
        kernel,
        out_shape=jax.ShapeDtypeStruct((n_pad, f_pad), jnp.float32),
        grid_spec=pltpu.PrefetchScalarGridSpec(
            num_scalar_prefetch=0,
            grid=(n_layers, nt, nt),
            in_specs=[
                # input features: resident once for the whole kernel
                pl.BlockSpec((n_pad, f_pad), lambda l, i, k: (0, 0)),
                # D^-1/2 vector: resident
                pl.BlockSpec((n_pad, 1), lambda l, i, k: (0, 0)),
                # adjacency: streamed (tile, tile) bf16 blocks (double-buffered)
                pl.BlockSpec((tile, tile), lambda l, i, k: (i, k)),
                # stacked [W; W_self], bias, LN gamma / beta: indexed by layer
                pl.BlockSpec((1, 2 * f_pad, f_pad), lambda l, i, k: (l, 0, 0)),
                pl.BlockSpec((1, 1, f_pad), lambda l, i, k: (l, 0, 0)),
                pl.BlockSpec((1, 1, f_pad), lambda l, i, k: (l, 0, 0)),
                pl.BlockSpec((1, 1, f_pad), lambda l, i, k: (l, 0, 0)),
            ],
            out_specs=pl.BlockSpec((n_pad, f_pad), lambda l, i, k: (0, 0)),
            scratch_shapes=[
                pltpu.VMEM((2 * n_pad, f_pad), jnp.float32),   # activation ping-pong
                pltpu.VMEM((tile, f_pad), jnp.float32),        # adj@(d*x) accumulator
            ]),
        compiler_params=pltpu.CompilerParams(
            # All axes "arbitrary": the layer/k axes are sequential by nature and
            # the row axis shares the activation scratch across layers (megacore
            # sharding would break the cross-layer dependence through VMEM).
            dimension_semantics=("arbitrary", "arbitrary", "arbitrary"),
            vmem_limit_bytes=48 * 1024 * 1024),
    )(x_pad, d, adj_lo, wcat, bias, gamma, beta)

    return out_pad[:n, :f]


# ---------------------------------------------------------------------------
# GraphBaseBlock wrapper (aggrmethod handling) + parameter init + reference.
# ---------------------------------------------------------------------------
def _doconcat(x, subx, aggrmethod):
    if x is None:
        return subx
    if aggrmethod == "concat":
        return jnp.concatenate((x, subx), axis=1)
    if aggrmethod == "add":
        return x + subx
    if aggrmethod == "nores":
        return x
    raise ValueError(aggrmethod)


def graph_base_block_forward(x, adj, layer_params, aggrmethod="nores",
                             dense=False, tile_n=128):
    """GraphBaseBlock.forward (eval mode), fused into a single Pallas kernel."""
    if dense:
        # TODO(synk): dense=True needs every intermediate layer output; only the
        # fused chained path (dense=False) is implemented.
        raise NotImplementedError("dense=True is not supported by the fused kernel")
    out = gcn_block_forward(x, adj, layer_params, tile_n=tile_n)
    return _doconcat(out, x, aggrmethod)


def init_params(key, feature_size):
    """Deterministic parameter init mirroring GraphConvolutionBS shapes."""
    params = []
    for i in range(len(feature_size) - 1):
        f_in, f_out = feature_size[i], feature_size[i + 1]
        key, k1, k2, k3 = jax.random.split(key, 4)
        bound_w = 1.0 / math.sqrt(f_out)
        w = jax.random.uniform(k1, (f_in, f_out), jnp.float32, -bound_w, bound_w)
        w_self = jax.random.uniform(k2, (f_in, f_out), jnp.float32,
                                    -bound_w, bound_w)
        b = jax.random.uniform(k3, (1, f_out), jnp.float32, -bound_w, bound_w)
        gamma = jnp.ones((1, f_out), jnp.float32)   # LayerNorm weight
        beta = jnp.zeros((1, f_out), jnp.float32)   # LayerNorm bias
        params.append((w, w_self, b, gamma, beta))
    return params


def _reference_forward(x, adj, layer_params, aggrmethod="nores"):
    """Pure-JAX eval-mode reference (uses the same bf16-rounded adjacency)."""
    adj_q = adj.astype(jnp.bfloat16).astype(jnp.float32)
    d = jax.lax.rsqrt(1.0 + jnp.sum(adj, axis=0))[:, None]
    h = x
    for (w, w_self, b, g, bt) in layer_params:
        xs = (d * h).astype(jnp.bfloat16).astype(jnp.float32)
        agg = d * jnp.dot(adj_q, xs, preferred_element_type=jnp.float32)
        out = (jnp.dot(agg, w, precision=jax.lax.Precision.HIGHEST)
               + jnp.dot(h, w_self, precision=jax.lax.Precision.HIGHEST)
               + jnp.reshape(b, (1, -1)))
        hh = jnp.maximum(out, 0.0) + h
        mean = jnp.mean(hh, axis=-1, keepdims=True)
        var = jnp.mean((hh - mean) ** 2, axis=-1, keepdims=True)
        h = ((hh - mean) * jax.lax.rsqrt(var + _LN_EPS) * jnp.reshape(g, (1, -1))
             + jnp.reshape(bt, (1, -1)))
    return _doconcat(h, x, aggrmethod)


if __name__ == "__main__":
    # Small deterministic example: N=256 nodes (2x2 adjacency tiles), F=32
    # features (exercises lane padding + masked LayerNorm), 2 base layers.
    N, F = 256, 32
    nbaselayer = 2
    feature_size = [F] * (nbaselayer + 1)

    key = jax.random.PRNGKey(0)
    kx, kadj, kp = jax.random.split(key, 3)
    x = jax.random.normal(kx, (N, F), jnp.float32)
    adj = jax.random.uniform(kadj, (N, N), jnp.float32)  # non-negative weights

    params = init_params(kp, feature_size)

    out = graph_base_block_forward(x, adj, params, aggrmethod="nores",
                                   dense=False)
    out = jax.block_until_ready(out)

    assert out.shape == (N, F) and out.dtype == jnp.float32
    assert bool(jnp.all(jnp.isfinite(out)))

    ref = _reference_forward(x, adj, params, aggrmethod="nores")
    err = float(jnp.max(jnp.abs(out - ref)))
    assert err < 3e-2, f"max abs error vs reference: {err}"
    print("KERNEL_OK")
</pallas_src>

<mosaic_0001>
module attributes {stable_mosaic.version = 11 : i64} {
  func.func @_degree_kernel(%arg0: i32, %arg1: i32, %arg2: memref<128x128xf32, #tpu.memory_space<vmem>>, %arg3: memref<1x128xf32, #tpu.memory_space<vmem>>) attributes {dimension_semantics = [#tpu.dimension_semantics<parallel>, #tpu.dimension_semantics<arbitrary>], iteration_bounds = array<i64: 2, 2>, scalar_prefetch = 0 : i64, scratch_operands = 0 : i64, tpu.core_type = #tpu.core_type<tc>, window_params = [{transform_indices = @transform_0, window_bounds = array<i64: 128, 128>}, {transform_indices = @transform_1, window_bounds = array<i64: 1, 128>}]} {
    %c0_i32 = arith.constant 0 : i32
    %0 = arith.cmpi eq, %arg1, %c0_i32 : i32
    %1 = arith.extui %0 : i1 to i32
    %c0_i32_0 = arith.constant 0 : i32
    %2 = arith.cmpi ne, %1, %c0_i32_0 : i32
    scf.if %2 {
      %cst_7 = arith.constant 1.000000e+00 : f32
      %12 = vector.broadcast %cst_7 : f32 to vector<1x128xf32>
      %c0_8 = arith.constant 0 : index
      %c0_9 = arith.constant 0 : index
      %13 = vector.load %arg3[%c0_8, %c0_9] : memref<1x128xf32, #tpu.memory_space<vmem>>, vector<1x128xf32>
      tpu.vector_store %arg3[%c0_8, %c0_9], %12 {strides = array<i32>} : memref<1x128xf32, #tpu.memory_space<vmem>>, vector<1x128xf32>,
    } else {
    }
    %c0 = arith.constant 0 : index
    %c0_1 = arith.constant 0 : index
    %3 = vector.load %arg3[%c0, %c0_1] : memref<1x128xf32, #tpu.memory_space<vmem>>, vector<1x128xf32>
    %c0_2 = arith.constant 0 : index
    %c0_3 = arith.constant 0 : index
    %4 = vector.load %arg2[%c0_2, %c0_3] : memref<128x128xf32, #tpu.memory_space<vmem>>, vector<128x128xf32>
    %cst = arith.constant dense<0.000000e+00> : vector<128xf32>
    %5 = vector.multi_reduction <add>, %4, %cst [0] : vector<128x128xf32> to vector<128xf32>
    %6 = vector.shape_cast %5 : vector<128xf32> to vector<1x128xf32>
    %7 = arith.addf %3, %6 : vector<1x128xf32>
    %c0_4 = arith.constant 0 : index
    %c0_5 = arith.constant 0 : index
    %8 = vector.load %arg3[%c0_4, %c0_5] : memref<1x128xf32, #tpu.memory_space<vmem>>, vector<1x128xf32>
    tpu.vector_store %arg3[%c0_4, %c0_5], %7 {strides = array<i32>} : memref<1x128xf32, #tpu.memory_space<vmem>>, vector<1x128xf32>,
    %c1_i32 = arith.constant 1 : i32
    %9 = arith.cmpi eq, %arg1, %c1_i32 : i32
    %10 = arith.extui %9 : i1 to i32
    %c0_i32_6 = arith.constant 0 : i32
    %11 = arith.cmpi ne, %10, %c0_i32_6 : i32
    scf.if %11 {
      %c0_7 = arith.constant 0 : index
      %c0_8 = arith.constant 0 : index
      %12 = vector.load %arg3[%c0_7, %c0_8] : memref<1x128xf32, #tpu.memory_space<vmem>>, vector<1x128xf32>
      %13 = math.rsqrt %12 : vector<1x128xf32>
      %c0_9 = arith.constant 0 : index
      %c0_10 = arith.constant 0 : index
      %14 = vector.load %arg3[%c0_9, %c0_10] : memref<1x128xf32, #tpu.memory_space<vmem>>, vector<1x128xf32>
      tpu.vector_store %arg3[%c0_9, %c0_10], %13 {strides = array<i32>} : memref<1x128xf32, #tpu.memory_space<vmem>>, vector<1x128xf32>,
    } else {
    }
    return
  }
  func.func @transform_0(%arg0: i32, %arg1: i32) -> (i32, i32) {
    %c0_i32 = arith.constant 0 : i32
    return %arg1, %arg0 : i32, i32
  }
  func.func @transform_1(%arg0: i32, %arg1: i32) -> (i32, i32) {
    %c0_i32 = arith.constant 0 : i32
    %c0_i32_0 = arith.constant 0 : i32
    return %c0_i32, %arg0 : i32, i32
  }
}

</mosaic_0001>

<llo_original>
// kernel: tpu_custom_call.1
$region0: #{tpu_custom_call.1}
  #allocation0 [shape = 'u32[]', space=smem, size = 0x4, offset = 0x4, fixed_abs, tag = 'smem constant byte address 0x4 - core index']
  #allocation1 [shape = 'u32[144,128]{1,0:T(1,128)}', space=vmem, size = 0x12000, scoped, tag = 'internal scratch']
  %s0 = inlined_call_operand.hbm [shape: f32[256,256], index: 0, kind: input, shape index: {}]
  %s1 = inlined_call_operand.hbm [shape: f32[1,256], index: 1, kind: output, shape index: {}]
  %s2 = sld [smem:[#allocation0]]
  $region49: #{tpu_custom_call.1} parent=0
    _
  %s4 = ssub.s32 1, %s2
  %s5 = scalar_select 0, %s4, %s2
  $region1: #{tpu_custom_call.1} parent=0
    #allocation2 [shape = 'u8[131072]{0}', space=vmem, size = 0x20000, scoped, tag = 'input window, operand 0']
    #allocation3 [shape = 's32[2]{0}', space=sflag, size = 0x8, scoped, tag = 'scoped memory for tpu_custom_call.1']
    #allocation4 [shape = 's32[2]{0}', space=sflag, size = 0x8, scoped, tag = 'scoped memory for tpu_custom_call.1']
    #allocation5 [shape = 'u8[1024]{0}', space=vmem, size = 0x400, scoped, tag = 'output window, operand 0']
    %6 = vsyncpa [#allocation3], 0
    %s7 = scalar_lea.sflag [#allocation3], 1
    %8 = vsyncpa %s7, 0
    %9 = vsyncpa [#allocation4], 0
    %s10 = scalar_lea.sflag [#allocation4], 1
    %11 = vsyncpa %s10, 0
    loop: start=0, step=1, limit=6
    $region2: #{tpu_custom_call.1} parent=1 // loop_pre_header
      _
    $region3: #{tpu_custom_call.1} parent=1 // loop_header
      %s13 = sphi 0, %s17
      %p14 = scmp.ge.s32.totalorder %s13, 6
      %s20 = sphi 0, %s32
      %s21 = sphi 0, %s28
      %s22 = sphi 0, %s20
      %s23 = sphi 0, %s21
      %s24 = sphi 0, %s22
      %s25 = sphi 0, %s23
      %s37 = sphi 0, %s39
      %s40 = sphi 0, %s37
      %s41 = sphi 0, %s40
      %s57 = sphi 0, %s41
      %s63 = sphi 0, %s65
      %s66 = sphi 0, %s63
      %s67 = sphi 0, %s66
      %s83 = sphi 0, %s67
    $region4: #{tpu_custom_call.1} parent=1 // loop_header_branch
      %16 = sbr.rel (%p14) target = $region8
    $region5: #{tpu_custom_call.1} parent=1 // loop_body
      %s18 = ssub.s32 %s13, 1
      %s19 = ssub.s32 %s13, 2
      %s26 = sadd.s32 1, %s21
      %p27 = scmp.ge.s32.totalorder %s26, 2
      %s28 = scalar_select %p27, 0, %s26
      %s29 = sadd.s32 1, %s20
      %s30 = scalar_select %p27, %s29, %s20
      %p31 = scmp.ge.s32.totalorder %s30, 2
      %s32 = scalar_select %p31, 0, %s30
      %s33 = ssub.s32 %s21, %s28
      %s34 = ssub.s32 %s20, %s32
      %s35 = sor.u32 %s33, %s34
      %p36 = scmp.eq.s32.totalorder %s35, 0
      %s38 = sadd.s32 %s37, 1
      %s39 = scalar_select %p36, %s37, %s38
      %p42 = pneg %p36
      %p43 = scmp.eq.s32.totalorder %s13, 3
      %p44 = por %p42, %p43
      %p45 = scmp.ne.s32.totalorder %s37, %s40
      %p46 = scmp.eq.s32.totalorder %s13, 0
      %p47 = por %p45, %p46
      %p48 = scmp.ne.s32.totalorder %s37, %s40
      %p49 = scmp.eq.s32.totalorder %s18, 3
      %p50 = por %p48, %p49
      %p51 = scmp.ne.s32.totalorder %s40, %s41
      %p52 = scmp.eq.s32.totalorder %s18, 0
      %p53 = por %p51, %p52
      %p54 = scmp.ne.s32.totalorder %s40, %s41
      %p55 = scmp.eq.s32.totalorder %s19, 3
      %p56 = por %p54, %p55
      %p58 = scmp.ne.s32.totalorder %s41, %s57
      %p59 = scmp.eq.s32.totalorder %s19, 0
      %p60 = por %p58, %p59
      %s61 = ssub.s32 %s20, %s32
      %p62 = scmp.eq.s32.totalorder %s61, 0
      %s64 = sadd.s32 %s63, 1
      %s65 = scalar_select %p62, %s63, %s64
      %p68 = pneg %p62
      %p69 = scmp.eq.s32.totalorder %s13, 3
      %p70 = por %p68, %p69
      %p71 = scmp.ne.s32.totalorder %s63, %s66
      %p72 = scmp.eq.s32.totalorder %s13, 0
      %p73 = por %p71, %p72
      %p74 = scmp.ne.s32.totalorder %s63, %s66
      %p75 = scmp.eq.s32.totalorder %s18, 3
      %p76 = por %p74, %p75
      %p77 = scmp.ne.s32.totalorder %s66, %s67
      %p78 = scmp.eq.s32.totalorder %s18, 0
      %p79 = por %p77, %p78
      %p80 = scmp.ne.s32.totalorder %s66, %s67
      %p81 = scmp.eq.s32.totalorder %s19, 3
      %p82 = por %p80, %p81
      %p84 = scmp.ne.s32.totalorder %s67, %s83
      %p85 = scmp.eq.s32.totalorder %s19, 0
      %p86 = por %p84, %p85
      %p87 = scmp.le.s32.totalorder 1, %s13
      %p88 = scmp.lt.s32.totalorder %s13, 5
      %p89 = pnand %p87, %p88
      %p90 = pneg %p89
      // Predicated region
      $region9: #{tpu_custom_call.1} parent=5 // pred_check
        _
      $region10: #{tpu_custom_call.1} parent=5 // pred_check_branch
        %92 = sbr.rel (%p89) target = $region12
      $region11: #{tpu_custom_call.1} parent=5 // pred_region
        %s93 = ssub.s32 %s13, 1
      $region12: #{tpu_custom_call.1} parent=5 // pred_fallthru
        _
      %p94 = scmp.lt.s32.totalorder %s13, 4
      // Predicated region
      $region13: #{tpu_custom_call.1} parent=5 // pred_check
        %p95 = pneg %p94
      $region14: #{tpu_custom_call.1} parent=5 // pred_check_branch
        %97 = sbr.rel (%p95) target = $region16
      $region15: #{tpu_custom_call.1} parent=5 // pred_region
        // Predicated region
        $region17: #{tpu_custom_call.1} parent=15 // pred_check
          %p98 = pneg %p47
        $region18: #{tpu_custom_call.1} parent=15 // pred_check_branch
          %100 = sbr.rel (%p98) target = $region20
        $region19: #{tpu_custom_call.1} parent=15 // pred_region
          %s101 = sand.u32 %s37, 1
          %s102 = scalar_lea.sflag [#allocation3], %s101
          %s103 = sand.u32 %s37, 1
          %s104 = smul.addr %s103, 128
          %s105 = scalar_lea.vmem [#allocation2], %s104
          %s106 = smul.u32 16, %s21
          %s108 = ssub.s32 2048, 2048
          %109 = vsyncadd %s102, %s108
          %s110 = smul.addr %s106, 2
          %s111 = sadd.s32 %s20, %s110
          %s112 = smul.addr %s111, 128
          %s113 = scalar_lea.hbm %s0, %s112
          %s114 = sshll.u32 %s105, 4
          %s115 = int_to_ptr.vmem [resolvable:$true] %s114
          %120 = dma.hbm_to_vmem [thread:$0]  %s113, 2048, %s115, %s102, 256, 128, 8
        $region20: #{tpu_custom_call.1} parent=15 // pred_fallthru
          _
      $region16: #{tpu_custom_call.1} parent=5 // pred_fallthru
        _
      %p121 = scmp.le.s32.totalorder 1, %s13
      %p122 = scmp.lt.s32.totalorder %s13, 5
      %p123 = pnand %p121, %p122
      %p124 = pneg %p123
      // Predicated region
      $region21: #{tpu_custom_call.1} parent=5 // pred_check
        _
      $region22: #{tpu_custom_call.1} parent=5 // pred_check_branch
        %126 = sbr.rel (%p123) target = $region24
      $region23: #{tpu_custom_call.1} parent=5 // pred_region
        %s127 = ssub.s32 %s13, 1
        %s128 = sand.u32 %s40, 1
        %s129 = scalar_lea.sflag [#allocation3], %s128
        %s130 = sand.u32 %s40, 1
        %s131 = smul.addr %s130, 128
        %s132 = scalar_lea.vmem [#allocation2], %s131
        // Predicated region
        $region25: #{tpu_custom_call.1} parent=23 // pred_check
          %p133 = pneg %p53
        $region26: #{tpu_custom_call.1} parent=23 // pred_check_branch
          %135 = sbr.rel (%p133) target = $region28
        $region27: #{tpu_custom_call.1} parent=23 // pred_region
          %136 = dma.done %s129, 2048
        $region28: #{tpu_custom_call.1} parent=23 // pred_fallthru
          _
        %s137 = sand.u32 %s40, 1
        %s138 = scalar_lea.sflag [#allocation3], %s137
        %s139 = sand.u32 %s40, 1
        %s140 = smul.addr %s139, 128
        %s141 = scalar_lea.vmem [#allocation2], %s140
        %p142 = pneg %p53
        %p143 = pneg %p50
        %p144 = pneg %p79
        %p145 = pneg %p76
        %s146 = sand.u32 %s66, 1
        %s147 = scalar_lea.sflag [#allocation4], %s146
        %s148 = sand.u32 %s66, 1
        %s149 = scalar_lea.vmem [#allocation5], %s148
        %s150 = smul.u32 16, %s23
        %p151 = scmp.eq.s32.totalorder %s23, 0
        // Predicated region
        $region29: #{tpu_custom_call.1} parent=23 // pred_check
          %p152 = pneg %p151
        $region30: #{tpu_custom_call.1} parent=23 // pred_check_branch
          %154 = sbr.rel (%p152) target = $region32
        $region31: #{tpu_custom_call.1} parent=23 // pred_region
          %155 = vst [vmem:[%s149] sm:$0x1] 1.0
        $region32: #{tpu_custom_call.1} parent=23 // pred_fallthru
          _
        %v156 = vld [vmem:[%s149] sm:$0x1]
        %v157 = vld [vmem:[%s132] sm:$0xff]
        %v158 = vld [vmem:[%s132 + $0x8] sm:$0xff]
        %v159 = vld [vmem:[%s132 + $0x10] sm:$0xff]
        %v160 = vld [vmem:[%s132 + $0x18] sm:$0xff]
        %v161 = vld [vmem:[%s132 + $0x20] sm:$0xff]
        %v162 = vld [vmem:[%s132 + $0x28] sm:$0xff]
        %v163 = vld [vmem:[%s132 + $0x30] sm:$0xff]
        %v164 = vld [vmem:[%s132 + $0x38] sm:$0xff]
        %v165 = vld [vmem:[%s132 + $0x40] sm:$0xff]
        %v166 = vld [vmem:[%s132 + $0x48] sm:$0xff]
        %v167 = vld [vmem:[%s132 + $0x50] sm:$0xff]
        %v168 = vld [vmem:[%s132 + $0x58] sm:$0xff]
        %v169 = vld [vmem:[%s132 + $0x60] sm:$0xff]
        %v170 = vld [vmem:[%s132 + $0x68] sm:$0xff]
        %v171 = vld [vmem:[%s132 + $0x70] sm:$0xff]
        %v172 = vld [vmem:[%s132 + $0x78] sm:$0xff]
        %v173 = vadd.f32 %v157, %v158
        %v174 = vadd.f32 %v173, %v159
        %v175 = vadd.f32 %v174, %v160
        %v176 = vadd.f32 %v175, %v161
        %v177 = vadd.f32 %v176, %v162
        %v178 = vadd.f32 %v177, %v163
        %v179 = vadd.f32 %v178, %v164
        %v180 = vadd.f32 %v179, %v165
        %v181 = vadd.f32 %v180, %v166
        %v182 = vadd.f32 %v181, %v167
        %v183 = vadd.f32 %v182, %v168
        %v184 = vadd.f32 %v183, %v169
        %v185 = vadd.f32 %v184, %v170
        %v186 = vadd.f32 %v185, %v171
        %v187 = vadd.f32 %v186, %v172
        %v188 = vrot.slane %v187, 4
        %v189 = vadd.f32 %v187, %v188
        %v190 = vrot.slane %v189, 2
        %v191 = vadd.f32 %v189, %v190
        %v192 = vrot.slane %v191, 1
        %v193 = vadd.f32 %v191, %v192
        %v194 = vadd.f32 %v156, %v193
        %195 = vst [vmem:[%s149] sm:$0x1] %v194
        %p196 = scmp.eq.s32.totalorder %s23, 1
        // Predicated region
        $region33: #{tpu_custom_call.1} parent=23 // pred_check
          %p197 = pneg %p196
        $region34: #{tpu_custom_call.1} parent=23 // pred_check_branch
          %199 = sbr.rel (%p197) target = $region36
        $region35: #{tpu_custom_call.1} parent=23 // pred_region
          %v200 = vld [vmem:[%s149] sm:$0x1]
          %v201 = vrsqrt.pop %v200
          %202 = vst [vmem:[%s149] sm:$0x1] %v201
        $region36: #{tpu_custom_call.1} parent=23 // pred_fallthru
          _
        %s203 = sand.u32 %s66, 1
        %s204 = scalar_lea.sflag [#allocation4], %s203
        %s205 = sand.u32 %s66, 1
        %s206 = scalar_lea.vmem [#allocation5], %s205
        // Predicated region
        $region37: #{tpu_custom_call.1} parent=23 // pred_check
          %p207 = pneg %p76
        $region38: #{tpu_custom_call.1} parent=23 // pred_check_branch
          %209 = sbr.rel (%p207) target = $region40
        $region39: #{tpu_custom_call.1} parent=23 // pred_region
          %s211 = ssub.s32 16, 16
          %212 = vsyncadd %s204, %s211
          %s213 = smul.addr %s22, 16
          %s214 = scalar_lea.hbm %s1, %s213
          %s216 = sshll.u32 %s206, 4
          %s217 = int_to_ptr.vmem [resolvable:$true] %s216
          %219 = dma.vmem_to_hbm [thread:$0]  %s217, 16, %s214, %s204
        $region40: #{tpu_custom_call.1} parent=23 // pred_fallthru
          _
      $region24: #{tpu_custom_call.1} parent=5 // pred_fallthru
        _
      %p220 = scmp.le.s32.totalorder 2, %s13
      // Predicated region
      $region41: #{tpu_custom_call.1} parent=5 // pred_check
        %p221 = pneg %p220
      $region42: #{tpu_custom_call.1} parent=5 // pred_check_branch
        %223 = sbr.rel (%p221) target = $region44
      $region43: #{tpu_custom_call.1} parent=5 // pred_region
        %s224 = ssub.s32 %s13, 2
        // Predicated region
        $region45: #{tpu_custom_call.1} parent=43 // pred_check
          %p225 = pneg %p82
        $region46: #{tpu_custom_call.1} parent=43 // pred_check_branch
          %227 = sbr.rel (%p225) target = $region48
        $region47: #{tpu_custom_call.1} parent=43 // pred_region
          %s228 = sand.u32 %s67, 1
          %s229 = scalar_lea.sflag [#allocation4], %s228
          %s230 = sand.u32 %s67, 1
          %s231 = scalar_lea.vmem [#allocation5], %s230
          %232 = dma.done %s229, 16
        $region48: #{tpu_custom_call.1} parent=43 // pred_fallthru
          _
      $region44: #{tpu_custom_call.1} parent=5 // pred_fallthru
        _
    $region6: #{tpu_custom_call.1} parent=1 // loop_footer
      %s17 = sadd.s32 1, %s13
    $region7: #{tpu_custom_call.1} parent=1 // loop_footer_branch
      %12 = sbr.rel target = $region3
    $region8: #{tpu_custom_call.1} parent=1 // loop_exit
      _
    %233 = vsyncpa [#allocation3], 1
    %s234 = scalar_lea.sflag [#allocation3], 1
    %235 = vsyncpa %s234, 1
    %236 = vsyncpa [#allocation4], 1
    %s237 = scalar_lea.sflag [#allocation4], 1
    %238 = vsyncpa %s237, 1

</llo_original>
